<compile_context>
chip_gen: v7x
topology: tpu7x:2x2x1
jax: 0.10.0
libtpu: 0.0.40
codegen_flags: <defaults>
</compile_context>

<pallas_src>
import functools

import jax
import jax.numpy as jnp
from jax.experimental import pallas as pl
from jax.experimental.pallas import tpu as pltpu


def _round_up(x, m):
    return (x + m - 1) // m * m


def _se_kernel(qk_ref, w_ref, o_ref, acc_ref, *, scale):
    # qk_ref : (2, Bb, tT, Cp) bf16  -- q in slot 0, k in slot 1
    # w_ref  : (Cp, Cp)        bf16  -- torch Linear weight, (out, in)
    # o_ref  : (Bb, Cp, Cp)    out dtype
    # acc_ref: (Bb, Cp, Cp)    f32 accumulator, resident across the T axis
    t = pl.program_id(1)

    @pl.when(t == 0)
    def _():
        acc_ref[...] = jnp.zeros_like(acc_ref)

    two, bb, tt, cp = qk_ref.shape
    # One MXU pass projects both q and k against the shared stationary weight.
    qk = qk_ref[...].reshape(two * bb * tt, cp)                  # bf16
    proj = jax.lax.dot_general(                                  # x @ W^T
        qk, w_ref[...], (((1,), (1,)), ((), ())),
        preferred_element_type=jnp.float32)                      # f32 accum
    proj = proj.astype(jnp.bfloat16).reshape(two, bb, tt, cp)
    qp, kp = proj[0], proj[1]                                    # (Bb, tT, Cp)

    # Partial x = q'^T @ k' over this T tile, accumulated in f32.
    acc_ref[...] += jnp.einsum("btc,btd->bcd", qp, kp,
                               preferred_element_type=jnp.float32)

    @pl.when(t == pl.num_programs(1) - 1)
    def _():
        # sigmoid(2 * x / temperature): both folded into one constant scale.
        o_ref[...] = jax.nn.sigmoid(acc_ref[...] * scale).astype(o_ref.dtype)


def se_layer(q, k, w1, *, out_dtype=jnp.float32):
    """Pallas SELayer forward. q, k: (B, T, C); w1: (C, C). Returns (B, C, C)."""
    B, T, C = q.shape
    scale = 2.0 / (float(C) ** 0.5)        # fuses "+ x" and the temperature

    # ---- tiling (kept within a few MiB so default scoped VMEM is enough) ----
    Cp = _round_up(C, 128)                                   # lane-dense
    Bb = max(1, min(B, 8, (4 * 1024 * 1024) // (Cp * Cp * 4)))
    Bp = _round_up(B, Bb)
    tT_cap = max(16, ((2 * 1024 * 1024) // (2 * Bb * Cp * 2)) // 16 * 16)
    tT = min(_round_up(T, 16), tT_cap, 512)                  # multiple of 16
    Tp = _round_up(T, tT)

    # ---- pad (zero padding is exact for the contractions) + pack + bf16 ----
    qk = jnp.stack([
        jnp.pad(q, ((0, Bp - B), (0, Tp - T), (0, Cp - C))),
        jnp.pad(k, ((0, Bp - B), (0, Tp - T), (0, Cp - C))),
    ]).astype(jnp.bfloat16)                                  # (2, Bp, Tp, Cp)
    w_p = jnp.pad(w1, ((0, Cp - C), (0, Cp - C))).astype(jnp.bfloat16)

    kernel = functools.partial(_se_kernel, scale=scale)
    out = pl.pallas_call(
        kernel,
        out_shape=jax.ShapeDtypeStruct((Bp, Cp, Cp), out_dtype),
        grid_spec=pltpu.PrefetchScalarGridSpec(
            num_scalar_prefetch=0,
            grid=(Bp // Bb, Tp // tT),
            in_specs=[
                pl.BlockSpec((2, Bb, tT, Cp), lambda b, t: (0, b, t, 0)),
                pl.BlockSpec((Cp, Cp), lambda b, t: (0, 0)),
            ],
            out_specs=pl.BlockSpec((Bb, Cp, Cp), lambda b, t: (b, 0, 0)),
            scratch_shapes=[pltpu.VMEM((Bb, Cp, Cp), jnp.float32)],
        ),
        compiler_params=pltpu.CompilerParams(
            dimension_semantics=("parallel", "arbitrary")),
    )(qk, w_p)
    return out[:B, :C, :C]


def se_layer_ref(q, k, w1):
    """Pure-JAX f32 reference mirroring the PyTorch forward exactly."""
    C = q.shape[-1]
    temperature = C ** 0.5
    qp = jnp.einsum("btc,dc->btd", q, w1)
    kp = jnp.einsum("btc,dc->btd", k, w1)
    x = jnp.einsum("btc,btd->bcd", qp / temperature, kp)
    return jax.nn.sigmoid(x + x)


def se_layer_ref_bf16(q, k, w1):
    """Reference mirroring the kernel's bf16 matmul operands / f32 accumulation."""
    f = lambda a: a.astype(jnp.bfloat16).astype(jnp.float32)
    C = q.shape[-1]
    qp = f(jnp.einsum("btc,dc->btd", f(q), f(w1)))
    kp = f(jnp.einsum("btc,dc->btd", f(k), f(w1)))
    x = jnp.einsum("btc,btd->bcd", qp, kp)
    return jax.nn.sigmoid(x * (2.0 / (C ** 0.5)))


if __name__ == "__main__":
    key = jax.random.PRNGKey(0)
    kq, kk, kw = jax.random.split(key, 3)

    B, T, C = 2, 16, 8          # batch=2, seq=16, channel=8
    q = jax.random.normal(kq, (B, T, C), dtype=jnp.float32)
    k = jax.random.normal(kk, (B, T, C), dtype=jnp.float32)

    # Deterministic weight init mimicking nn.Linear (uniform in +-1/sqrt(C)).
    bound = 1.0 / (C ** 0.5)
    w1 = jax.random.uniform(kw, (C, C), dtype=jnp.float32,
                            minval=-bound, maxval=bound)

    y = se_layer(q, k, w1)
    y = jax.block_until_ready(y)
    assert y.shape == (B, C, C)

    # Precision-matched check (bf16 matmul operands, f32 accumulation).
    y_bf = se_layer_ref_bf16(q, k, w1)
    assert jnp.allclose(y, y_bf, atol=1e-4, rtol=1e-4), "mismatch vs bf16 ref"

    # Loose check against the full-f32 PyTorch-equivalent reference.
    y_fp = se_layer_ref(q, k, w1)
    assert jnp.allclose(y, y_fp, atol=3e-2, rtol=3e-2), "mismatch vs f32 ref"

    print("KERNEL_OK")
</pallas_src>

<mosaic_0001>
module attributes {stable_mosaic.version = 11 : i64} {
  func.func @_se_kernel(%arg0: i32, %arg1: i32, %arg2: memref<2x2x16x128xbf16, #tpu.memory_space<vmem>>, %arg3: memref<128x128xbf16, #tpu.memory_space<vmem>>, %arg4: memref<2x128x128xf32, #tpu.memory_space<vmem>>, %arg5: memref<2x128x128xf32, #tpu.memory_space<vmem>>) attributes {dimension_semantics = [#tpu.dimension_semantics<parallel>, #tpu.dimension_semantics<arbitrary>], iteration_bounds = array<i64: 1, 1>, scalar_prefetch = 0 : i64, scratch_operands = 1 : i64, tpu.core_type = #tpu.core_type<tc>, window_params = [{transform_indices = @transform_0, window_bounds = array<i64: 2, 2, 16, 128>}, {pipeline_mode = #tpu.pipeline_mode<synchronous>, transform_indices = @transform_1, window_bounds = array<i64: 128, 128>}, {transform_indices = @transform_2, window_bounds = array<i64: 2, 128, 128>}]} {
    %c0_i32 = arith.constant 0 : i32
    %0 = arith.cmpi eq, %arg1, %c0_i32 : i32
    %1 = arith.extui %0 : i1 to i32
    %c0_i32_0 = arith.constant 0 : i32
    %2 = arith.cmpi ne, %1, %c0_i32_0 : i32
    scf.if %2 {
      %cst_15 = arith.constant 0.000000e+00 : f32
      %20 = vector.broadcast %cst_15 : f32 to vector<2x128x128xf32>
      %c0_16 = arith.constant 0 : index
      %c0_17 = arith.constant 0 : index
      %c0_18 = arith.constant 0 : index
      %21 = vector.load %arg5[%c0_16, %c0_17, %c0_18] : memref<2x128x128xf32, #tpu.memory_space<vmem>>, vector<2x128x128xf32>
      tpu.vector_store %arg5[%c0_16, %c0_17, %c0_18], %20 {strides = array<i32>} : memref<2x128x128xf32, #tpu.memory_space<vmem>>, vector<2x128x128xf32>,
    } else {
    }
    %c0 = arith.constant 0 : index
    %c0_1 = arith.constant 0 : index
    %c0_2 = arith.constant 0 : index
    %c0_3 = arith.constant 0 : index
    %3 = vector.load %arg2[%c0, %c0_1, %c0_2, %c0_3] : memref<2x2x16x128xbf16, #tpu.memory_space<vmem>>, vector<2x2x16x128xbf16>
    %4 = vector.shape_cast %3 : vector<2x2x16x128xbf16> to vector<64x128xbf16>
    %c0_4 = arith.constant 0 : index
    %c0_5 = arith.constant 0 : index
    %5 = vector.load %arg3[%c0_4, %c0_5] : memref<128x128xbf16, #tpu.memory_space<vmem>>, vector<128x128xbf16>
    %cst = arith.constant dense<0.000000e+00> : vector<64x128xf32>
    %6 = tpu.matmul %4, %5, %cst {dimension_numbers = #tpu.dot_dimension_numbers<[1], [1], [0], [0], [0, 0, 1, 0], [], []>} : vector<64x128xbf16>, vector<128x128xbf16>, vector<64x128xf32> -> vector<64x128xf32>
    %7 = arith.truncf %6 : vector<64x128xf32> to vector<64x128xbf16>
    %8 = vector.shape_cast %7 : vector<64x128xbf16> to vector<2x2x16x128xbf16>
    %9 = vector.extract_strided_slice %8 {offsets = [0, 0, 0, 0], sizes = [1, 2, 16, 128], strides = [1, 1, 1, 1]} : vector<2x2x16x128xbf16> to vector<1x2x16x128xbf16>
    %10 = vector.shape_cast %9 : vector<1x2x16x128xbf16> to vector<2x16x128xbf16>
    %11 = vector.extract_strided_slice %8 {offsets = [1, 0, 0, 0], sizes = [1, 2, 16, 128], strides = [1, 1, 1, 1]} : vector<2x2x16x128xbf16> to vector<1x2x16x128xbf16>
    %12 = vector.shape_cast %11 : vector<1x2x16x128xbf16> to vector<2x16x128xbf16>
    %c0_6 = arith.constant 0 : index
    %c0_7 = arith.constant 0 : index
    %c0_8 = arith.constant 0 : index
    %13 = vector.load %arg5[%c0_6, %c0_7, %c0_8] : memref<2x128x128xf32, #tpu.memory_space<vmem>>, vector<2x128x128xf32>
    "tpu.trace_start"() <{level = 10 : i32, message = "btc,btd->bcd"}> : () -> ()
    %cst_9 = arith.constant dense<0.000000e+00> : vector<2x128x128xf32>
    %14 = tpu.matmul %10, %12, %cst_9 {dimension_numbers = #tpu.dot_dimension_numbers<[1], [1], [2], [2], [0, 0, 0, 2, 1, 2], [0], [0]>} : vector<2x16x128xbf16>, vector<2x16x128xbf16>, vector<2x128x128xf32> -> vector<2x128x128xf32>
    "tpu.trace_stop"() : () -> ()
    %15 = arith.addf %13, %14 : vector<2x128x128xf32>
    %c0_10 = arith.constant 0 : index
    %c0_11 = arith.constant 0 : index
    %c0_12 = arith.constant 0 : index
    %16 = vector.load %arg5[%c0_10, %c0_11, %c0_12] : memref<2x128x128xf32, #tpu.memory_space<vmem>>, vector<2x128x128xf32>
    tpu.vector_store %arg5[%c0_10, %c0_11, %c0_12], %15 {strides = array<i32>} : memref<2x128x128xf32, #tpu.memory_space<vmem>>, vector<2x128x128xf32>,
    %c0_i32_13 = arith.constant 0 : i32
    %17 = arith.cmpi eq, %arg1, %c0_i32_13 : i32
    %18 = arith.extui %17 : i1 to i32
    %c0_i32_14 = arith.constant 0 : i32
    %19 = arith.cmpi ne, %18, %c0_i32_14 : i32
    scf.if %19 {
      %c0_15 = arith.constant 0 : index
      %c0_16 = arith.constant 0 : index
      %c0_17 = arith.constant 0 : index
      %20 = vector.load %arg5[%c0_15, %c0_16, %c0_17] : memref<2x128x128xf32, #tpu.memory_space<vmem>>, vector<2x128x128xf32>
      %cst_18 = arith.constant 0.707106769 : f32
      %21 = vector.broadcast %cst_18 : f32 to vector<2x128x128xf32>
      %22 = arith.mulf %20, %21 : vector<2x128x128xf32>
      %23 = arith.negf %22 : vector<2x128x128xf32>
      %24 = math.exp %23 : vector<2x128x128xf32>
      %cst_19 = arith.constant 1.000000e+00 : f32
      %25 = vector.broadcast %cst_19 : f32 to vector<2x128x128xf32>
      %26 = arith.addf %25, %24 : vector<2x128x128xf32>
      %27 = arith.divf %25, %26 : vector<2x128x128xf32>
      %c0_20 = arith.constant 0 : index
      %c0_21 = arith.constant 0 : index
      %c0_22 = arith.constant 0 : index
      %28 = vector.load %arg4[%c0_20, %c0_21, %c0_22] : memref<2x128x128xf32, #tpu.memory_space<vmem>>, vector<2x128x128xf32>
      tpu.vector_store %arg4[%c0_20, %c0_21, %c0_22], %27 {strides = array<i32>} : memref<2x128x128xf32, #tpu.memory_space<vmem>>, vector<2x128x128xf32>,
    } else {
    }
    return
  }
  func.func @transform_0(%arg0: i32, %arg1: i32) -> (i32, i32, i32, i32) {
    %c0_i32 = arith.constant 0 : i32
    %c0_i32_0 = arith.constant 0 : i32
    %c0_i32_1 = arith.constant 0 : i32
    return %c0_i32, %arg0, %arg1, %c0_i32_0 : i32, i32, i32, i32
  }
  func.func @transform_1(%arg0: i32, %arg1: i32) -> (i32, i32) {
    %c0_i32 = arith.constant 0 : i32
    %c0_i32_0 = arith.constant 0 : i32
    %c0_i32_1 = arith.constant 0 : i32
    return %c0_i32, %c0_i32_0 : i32, i32
  }
  func.func @transform_2(%arg0: i32, %arg1: i32) -> (i32, i32, i32) {
    %c0_i32 = arith.constant 0 : i32
    %c0_i32_0 = arith.constant 0 : i32
    %c0_i32_1 = arith.constant 0 : i32
    return %arg0, %c0_i32, %c0_i32_0 : i32, i32, i32
  }
}

</mosaic_0001>

<llo_original>
// kernel: tpu_custom_call.1
$region0: #{tpu_custom_call.1}
  #allocation0 [shape = 'u32[]', space=smem, size = 0x4, offset = 0x4, fixed_abs, tag = 'smem constant byte address 0x4 - core index']
  #allocation1 [shape = 'u32[144,128]{1,0:T(1,128)}', space=vmem, size = 0x12000, scoped, tag = 'internal scratch']
  #allocation2 [shape = 'f32[2,128,128]{2,1,0:T(8,128)}', space=vmem, size = 0x20000, scoped, tag = 'scratch operand']
  %s0 = inlined_call_operand.hbm [shape: bf16[2,2,16,128], index: 0, kind: input, shape index: {}]
  %s1 = inlined_call_operand.hbm [shape: bf16[128,128], index: 1, kind: input, shape index: {}]
  %s2 = inlined_call_operand.hbm [shape: f32[2,128,128], index: 2, kind: output, shape index: {}]
  %s3 = sld [smem:[#allocation0]]
  $region34: #{tpu_custom_call.1} parent=0
    _
  %s5 = ssub.s32 1, %s3
  %s6 = scalar_select 0, %s5, %s3
  $region1: #{tpu_custom_call.1} parent=0
    #allocation3 [shape = 'u8[16384]{0}', space=vmem, size = 0x4000, scoped, tag = 'input window, operand 0, single buffered']
    #allocation4 [shape = 's32[1]{0}', space=sflag, size = 0x4, scoped, tag = 'scoped memory for tpu_custom_call.1']
    #allocation5 [shape = 's32[1]{0}', space=sflag, size = 0x4, scoped, tag = 'scoped memory for tpu_custom_call.1']
    #allocation6 [shape = 'u8[32768]{0}', space=vmem, size = 0x8000, scoped, tag = 'input window, operand 1, single buffered']
    #allocation7 [shape = 's32[1]{0}', space=sflag, size = 0x4, scoped, tag = 'scoped memory for tpu_custom_call.1']
    #allocation8 [shape = 'u8[131072]{0}', space=vmem, size = 0x20000, scoped, tag = 'output window, operand 0, single buffered']
    %7 = vsyncpa [#allocation4], 0
    %8 = vsyncpa [#allocation7], 0
    %9 = vsyncpa [#allocation5], 0
    // Predicated region
    $region2: #{tpu_custom_call.1} parent=1 // pred_check
      _
    $region3: #{tpu_custom_call.1} parent=1 // pred_check_branch
      %11 = sbr.rel (0) target = $region5
    $region4: #{tpu_custom_call.1} parent=1 // pred_region
      %s13 = ssub.s32 512, 512
      %14 = vsyncadd [#allocation4], %s13
      %s15 = sshll.u32 [#allocation3], 4
      %s16 = int_to_ptr.vmem [resolvable:$true] %s15
      %21 = dma.hbm_to_vmem [thread:$0]  %s0, 512, %s16, [#allocation4], 64, 64, 4
    $region5: #{tpu_custom_call.1} parent=1 // pred_fallthru
      _
    // Predicated region
    $region6: #{tpu_custom_call.1} parent=1 // pred_check
      _
    $region7: #{tpu_custom_call.1} parent=1 // pred_check_branch
      %23 = sbr.rel (0) target = $region9
    $region8: #{tpu_custom_call.1} parent=1 // pred_region
      %s25 = ssub.s32 1024, 1024
      %26 = vsyncadd [#allocation7], %s25
      %s27 = sshll.u32 [#allocation6], 4
      %s28 = int_to_ptr.vmem [resolvable:$true] %s27
      %33 = dma.hbm_to_vmem [thread:$0]  %s1, 1024, %s28, [#allocation7], 64, 64, 4
    $region9: #{tpu_custom_call.1} parent=1 // pred_fallthru
      _
    // Predicated region
    $region10: #{tpu_custom_call.1} parent=1 // pred_check
      _
    $region11: #{tpu_custom_call.1} parent=1 // pred_check_branch
      %35 = sbr.rel (0) target = $region13
    $region12: #{tpu_custom_call.1} parent=1 // pred_region
      %36 = dma.done [#allocation4], 512
    $region13: #{tpu_custom_call.1} parent=1 // pred_fallthru
      _
    // Predicated region
    $region14: #{tpu_custom_call.1} parent=1 // pred_check
      _
    $region15: #{tpu_custom_call.1} parent=1 // pred_check_branch
      %38 = sbr.rel (0) target = $region17
    $region16: #{tpu_custom_call.1} parent=1 // pred_region
      %39 = dma.done [#allocation7], 1024
    $region17: #{tpu_custom_call.1} parent=1 // pred_fallthru
      _
    %p41 = scmp.eq.s32.totalorder 0, 0
    // Predicated region
    $region18: #{tpu_custom_call.1} parent=1 // pred_check
      %p42 = pneg %p41
    $region19: #{tpu_custom_call.1} parent=1 // pred_check_branch
      %44 = sbr.rel (%p42) target = $region21
    $region20: #{tpu_custom_call.1} parent=1 // pred_region
      %45 = vst [vmem:[#allocation2] sm:$0xff] 0.0
      %46 = vst [vmem:[#allocation2 + $0x8] sm:$0xff] 0.0
      %47 = vst [vmem:[#allocation2 + $0x10] sm:$0xff] 0.0
      %48 = vst [vmem:[#allocation2 + $0x18] sm:$0xff] 0.0
      %49 = vst [vmem:[#allocation2 + $0x20] sm:$0xff] 0.0
      %50 = vst [vmem:[#allocation2 + $0x28] sm:$0xff] 0.0
      %51 = vst [vmem:[#allocation2 + $0x30] sm:$0xff] 0.0
      %52 = vst [vmem:[#allocation2 + $0x38] sm:$0xff] 0.0
      %53 = vst [vmem:[#allocation2 + $0x40] sm:$0xff] 0.0
      %54 = vst [vmem:[#allocation2 + $0x48] sm:$0xff] 0.0
      %55 = vst [vmem:[#allocation2 + $0x50] sm:$0xff] 0.0
      %56 = vst [vmem:[#allocation2 + $0x58] sm:$0xff] 0.0
      %57 = vst [vmem:[#allocation2 + $0x60] sm:$0xff] 0.0
      %58 = vst [vmem:[#allocation2 + $0x68] sm:$0xff] 0.0
      %59 = vst [vmem:[#allocation2 + $0x70] sm:$0xff] 0.0
      %60 = vst [vmem:[#allocation2 + $0x78] sm:$0xff] 0.0
      %61 = vst [vmem:[#allocation2 + $0x80] sm:$0xff] 0.0
      %62 = vst [vmem:[#allocation2 + $0x88] sm:$0xff] 0.0
      %63 = vst [vmem:[#allocation2 + $0x90] sm:$0xff] 0.0
      %64 = vst [vmem:[#allocation2 + $0x98] sm:$0xff] 0.0
      %65 = vst [vmem:[#allocation2 + $0xa0] sm:$0xff] 0.0
      %66 = vst [vmem:[#allocation2 + $0xa8] sm:$0xff] 0.0
      %67 = vst [vmem:[#allocation2 + $0xb0] sm:$0xff] 0.0
      %68 = vst [vmem:[#allocation2 + $0xb8] sm:$0xff] 0.0
      %69 = vst [vmem:[#allocation2 + $0xc0] sm:$0xff] 0.0
      %70 = vst [vmem:[#allocation2 + $0xc8] sm:$0xff] 0.0
      %71 = vst [vmem:[#allocation2 + $0xd0] sm:$0xff] 0.0
      %72 = vst [vmem:[#allocation2 + $0xd8] sm:$0xff] 0.0
      %73 = vst [vmem:[#allocation2 + $0xe0] sm:$0xff] 0.0
      %74 = vst [vmem:[#allocation2 + $0xe8] sm:$0xff] 0.0
      %75 = vst [vmem:[#allocation2 + $0xf0] sm:$0xff] 0.0
      %76 = vst [vmem:[#allocation2 + $0xf8] sm:$0xff] 0.0
    $region21: #{tpu_custom_call.1} parent=1 // pred_fallthru
      _
    %v77 = vld [vmem:[#allocation3] sm:$0xf]
    %v78 = vld [vmem:[#allocation3 + $0x4] sm:$0xf]
    %v79 = vld [vmem:[#allocation3 + $0x8] sm:$0xf]
    %v80 = vld [vmem:[#allocation3 + $0xc] sm:$0xf]
    %v81 = vld [vmem:[#allocation3 + $0x10] sm:$0xf]
    %v82 = vld [vmem:[#allocation3 + $0x14] sm:$0xf]
    %v83 = vld [vmem:[#allocation3 + $0x18] sm:$0xf]
    %v84 = vld [vmem:[#allocation3 + $0x1c] sm:$0xf]
    %v85 = vld [vmem:[#allocation6] sm:$0xf]
    %v86 = vld [vmem:[#allocation6 + $0x4] sm:$0xf]
    %v87 = vld [vmem:[#allocation6 + $0x8] sm:$0xf]
    %v88 = vld [vmem:[#allocation6 + $0xc] sm:$0xf]
    %v89 = vld [vmem:[#allocation6 + $0x10] sm:$0xf]
    %v90 = vld [vmem:[#allocation6 + $0x14] sm:$0xf]
    %v91 = vld [vmem:[#allocation6 + $0x18] sm:$0xf]
    %v92 = vld [vmem:[#allocation6 + $0x1c] sm:$0xf]
    %v93 = vld [vmem:[#allocation6 + $0x20] sm:$0xf]
    %v94 = vld [vmem:[#allocation6 + $0x24] sm:$0xf]
    %v95 = vld [vmem:[#allocation6 + $0x28] sm:$0xf]
    %v96 = vld [vmem:[#allocation6 + $0x2c] sm:$0xf]
    %v97 = vld [vmem:[#allocation6 + $0x30] sm:$0xf]
    %v98 = vld [vmem:[#allocation6 + $0x34] sm:$0xf]
    %v99 = vld [vmem:[#allocation6 + $0x38] sm:$0xf]
    %v100 = vld [vmem:[#allocation6 + $0x3c] sm:$0xf]
    %v109 = vunpack.c.l.b16 %v77
    %v110 = vunpack.c.l.b16 %v78
    %v111 = vunpack.c.l.b16 %v79
    %v112 = vunpack.c.l.b16 %v80
    %v113 = vunpack.c.l.b16 %v81
    %v114 = vunpack.c.l.b16 %v82
    %v115 = vunpack.c.l.b16 %v83
    %v116 = vunpack.c.l.b16 %v84
    %v117 = vpack.c.b16 %v110, %v109
    %v118 = vpack.c.b16 %v112, %v111
    %v119 = vpack.c.b16 %v114, %v113
    %v120 = vpack.c.b16 %v116, %v115
    %v141 = vunpack.c.l.b16 %v85
    %v142 = vunpack.c.l.b16 %v86
    %v143 = vunpack.c.l.b16 %v87
    %v144 = vunpack.c.l.b16 %v88
    %v145 = vunpack.c.l.b16 %v89
    %v146 = vunpack.c.l.b16 %v90
    %v147 = vunpack.c.l.b16 %v91
    %v148 = vunpack.c.l.b16 %v92
    %v149 = vunpack.c.l.b16 %v93
    %v150 = vunpack.c.l.b16 %v94
    %v151 = vunpack.c.l.b16 %v95
    %v152 = vunpack.c.l.b16 %v96
    %v153 = vunpack.c.l.b16 %v97
    %v154 = vunpack.c.l.b16 %v98
    %v155 = vunpack.c.l.b16 %v99
    %v156 = vunpack.c.l.b16 %v100
    %v157 = vpack.c.b16 %v142, %v141
    %v158 = vpack.c.b16 %v144, %v143
    %v159 = vpack.c.b16 %v146, %v145
    %v160 = vpack.c.b16 %v148, %v147
    %v161 = vpack.c.b16 %v150, %v149
    %v162 = vpack.c.b16 %v152, %v151
    %v163 = vpack.c.b16 %v154, %v153
    %v164 = vpack.c.b16 %v156, %v155
    %173 = vmatprep.subr.bf16.mxu0 0
    %174 = vmatpush1.bf16.xpose.msra.mxu0 %v157
    %175 = vmatprep.subr.bf16.mxu0 0
    %176 = vmatpush1.bf16.xpose.msra.mxu0 %v158
    %177 = vmatprep.subr.bf16.mxu0 0
    %178 = vmatpush1.bf16.xpose.msra.mxu0 %v159
    %179 = vmatprep.subr.bf16.mxu0 0
    %180 = vmatpush1.bf16.xpose.msra.mxu0 %v160
    %181 = vmatprep.subr.bf16.mxu0 0
    %182 = vmatpush1.bf16.xpose.msra.mxu0 %v161
    %183 = vmatprep.subr.bf16.mxu0 0
    %184 = vmatpush1.bf16.xpose.msra.mxu0 %v162
    %185 = vmatprep.subr.bf16.mxu0 0
    %186 = vmatpush1.bf16.xpose.msra.mxu0 %v163
    %187 = vmatprep.subr.bf16.mxu0 0
    %188 = vmatpush1.bf16.xpose.msra.mxu0 %v164
    %189 = vmatprep.subr.bf16.mxu0 0
    %190 = vmatpush1.bf16.xpose.msra.mxu0 0
    %191 = vmatprep.subr.bf16.mxu0 0
    %192 = vmatpush1.bf16.xpose.msra.mxu0 0
    %193 = vmatprep.subr.bf16.mxu0 0
    %194 = vmatpush1.bf16.xpose.msra.mxu0 0
    %195 = vmatprep.subr.bf16.mxu0 0
    %196 = vmatpush1.bf16.xpose.msra.mxu0 0
    %197 = vmatprep.subr.bf16.mxu0 0
    %198 = vmatpush1.bf16.xpose.msra.mxu0 0
    %199 = vmatprep.subr.bf16.mxu0 0
    %200 = vmatpush1.bf16.xpose.msra.mxu0 0
    %201 = vmatprep.subr.bf16.mxu0 0
    %202 = vmatpush1.bf16.xpose.msra.mxu0 0
    %203 = vmatprep.subr.bf16.mxu0 0
    %204 = vmatpush1.bf16.xpose.msra.mxu0 0
    %205 = vmatprep.mubr.bf16.mxu0 0
    %206 = vmatmul.mubr.bf16.gmra.mrb[0].mxu0 %v117
    %v207 = vpop.f32.mrb[0].mxu0
    %v208 = vadd.f32 0.0, %v207
    %v209 = vpop.f32.mrb[0].mxu0
    %v210 = vpop.f32.mrb[0].mxu0
    %v211 = vadd.f32 0.0, %v210
    %v212 = vpop.f32.mrb[0].mxu0
    %213 = vmatprep.mubr.bf16.mxu0 0
    %214 = vmatmul.mubr.bf16.gmra.mrb[0].mxu0 %v118
    %v215 = vpop.f32.mrb[0].mxu0
    %v216 = vadd.f32 0.0, %v215
    %v217 = vpop.f32.mrb[0].mxu0
    %v218 = vpop.f32.mrb[0].mxu0
    %v219 = vadd.f32 0.0, %v218
    %v220 = vpop.f32.mrb[0].mxu0
    %221 = vmatprep.mubr.bf16.mxu0 0
    %222 = vmatmul.mubr.bf16.gmra.mrb[0].mxu0 %v119
    %v223 = vpop.f32.mrb[0].mxu0
    %v224 = vadd.f32 0.0, %v223
    %v225 = vpop.f32.mrb[0].mxu0
    %v226 = vpop.f32.mrb[0].mxu0
    %v227 = vadd.f32 0.0, %v226
    %v228 = vpop.f32.mrb[0].mxu0
    %229 = vmatprep.mubr.bf16.mxu0 0
    %230 = vmatmul.mubr.bf16.gmra.mrb[0].mxu0 %v120
    %v231 = vpop.f32.mrb[0].mxu0
    %v232 = vadd.f32 0.0, %v231
    %v233 = vpop.f32.mrb[0].mxu0
    %v234 = vpop.f32.mrb[0].mxu0
    %v235 = vadd.f32 0.0, %v234
    %v236 = vpop.f32.mrb[0].mxu0
    %237 = vdwg.mxu0
    %v238 = vpack.c.bf16 %v211, %v208
    %v239 = vpack.c.bf16 %v219, %v216
    %v240 = vpack.c.bf16 %v227, %v224
    %v241 = vpack.c.bf16 %v235, %v232
    %v242 = vld [vmem:[#allocation2] sm:$0xff]
    %v243 = vld [vmem:[#allocation2 + $0x8] sm:$0xff]
    %v244 = vld [vmem:[#allocation2 + $0x10] sm:$0xff]
    %v245 = vld [vmem:[#allocation2 + $0x18] sm:$0xff]
    %v246 = vld [vmem:[#allocation2 + $0x20] sm:$0xff]
    %v247 = vld [vmem:[#allocation2 + $0x28] sm:$0xff]
    %v248 = vld [vmem:[#allocation2 + $0x30] sm:$0xff]
    %v249 = vld [vmem:[#allocation2 + $0x38] sm:$0xff]
    %v250 = vld [vmem:[#allocation2 + $0x40] sm:$0xff]
    %v251 = vld [vmem:[#allocation2 + $0x48] sm:$0xff]
    %v252 = vld [vmem:[#allocation2 + $0x50] sm:$0xff]
    %v253 = vld [vmem:[#allocation2 + $0x58] sm:$0xff]
    %v254 = vld [vmem:[#allocation2 + $0x60] sm:$0xff]
    %v255 = vld [vmem:[#allocation2 + $0x68] sm:$0xff]
    %v256 = vld [vmem:[#allocation2 + $0x70] sm:$0xff]
    %v257 = vld [vmem:[#allocation2 + $0x78] sm:$0xff]
    %v258 = vld [vmem:[#allocation2 + $0x80] sm:$0xff]
    %v259 = vld [vmem:[#allocation2 + $0x88] sm:$0xff]
    %v260 = vld [vmem:[#allocation2 + $0x90] sm:$0xff]
    %v261 = vld [vmem:[#allocation2 + $0x98] sm:$0xff]
    %v262 = vld [vmem:[#allocation2 + $0xa0] sm:$0xff]
    %v263 = vld [vmem:[#allocation2 + $0xa8] sm:$0xff]
    %v264 = vld [vmem:[#allocation2 + $0xb0] sm:$0xff]
    %v265 = vld [vmem:[#allocation2 + $0xb8] sm:$0xff]
    %v266 = vld [vmem:[#allocation2 + $0xc0] sm:$0xff]
    %v267 = vld [vmem:[#allocation2 + $0xc8] sm:$0xff]
    %v268 = vld [vmem:[#allocation2 + $0xd0] sm:$0xff]
    %v269 = vld [vmem:[#allocation2 + $0xd8] sm:$0xff]
    %v270 = vld [vmem:[#allocation2 + $0xe0] sm:$0xff]
    %v271 = vld [vmem:[#allocation2 + $0xe8] sm:$0xff]
    %v272 = vld [vmem:[#allocation2 + $0xf0] sm:$0xff]
    %v273 = vld [vmem:[#allocation2 + $0xf8] sm:$0xff]
    %274 = vxpose.xlu0.c.b16.start [1/8] %v238, 128
    %275 = vxpose.xlu0.c.b16.cont [2/8] 0, 128
    %276 = vxpose.xlu0.c.b16.cont [3/8] 0, 128
    %277 = vxpose.xlu0.c.b16.cont [4/8] 0, 128
    %278 = vxpose.xlu0.c.b16.cont [5/8] 0, 128
    %279 = vxpose.xlu0.c.b16.cont [6/8] 0, 128
    %280 = vxpose.xlu0.c.b16.cont [7/8] 0, 128
    %281 = vxpose.xlu0.c.b16.end [8/8] 0, 128
    %v282 = vpop.trf.xlu0
    %v283 = vpop.trf.xlu0
    %v284 = vpop.trf.xlu0
    %v285 = vpop.trf.xlu0
    %v286 = vpop.trf.xlu0
    %v287 = vpop.trf.xlu0
    %v288 = vpop.trf.xlu0
    %v289 = vpop.trf.xlu0
    %vm290 = vcmask 130048
    %v292 = vsel %vm290, %v282, 0
    %v295 = vsel %vm290, %v283, 0
    %v298 = vsel %vm290, %v284, 0
    %v301 = vsel %vm290, %v285, 0
    %v304 = vsel %vm290, %v286, 0
    %v307 = vsel %vm290, %v287, 0
    %v310 = vsel %vm290, %v288, 0
    %v313 = vsel %vm290, %v289, 0
    %315 = vmatprep.subr.bf16.mxu0 0
    %316 = vmatpush1.bf16.msra.mxu0 %v240
    %317 = vmatprep.subr.bf16.mxu0 0
    %318 = vmatpush1.bf16.msra.mxu0 0
    %319 = vmatprep.subr.bf16.mxu0 0
    %320 = vmatpush1.bf16.msra.mxu0 0
    %321 = vmatprep.subr.bf16.mxu0 0
    %322 = vmatpush1.bf16.msra.mxu0 0
    %323 = vmatprep.subr.bf16.mxu0 0
    %324 = vmatpush1.bf16.msra.mxu0 0
    %325 = vmatprep.subr.bf16.mxu0 0
    %326 = vmatpush1.bf16.msra.mxu0 0
    %327 = vmatprep.subr.bf16.mxu0 0
    %328 = vmatpush1.bf16.msra.mxu0 0
    %329 = vmatprep.subr.bf16.mxu0 0
    %330 = vmatpush1.bf16.msra.mxu0 0
    %331 = vmatprep.subr.bf16.mxu0 0
    %332 = vmatpush1.bf16.msra.mxu0 0
    %333 = vmatprep.subr.bf16.mxu0 0
    %334 = vmatpush1.bf16.msra.mxu0 0
    %335 = vmatprep.subr.bf16.mxu0 0
    %336 = vmatpush1.bf16.msra.mxu0 0
    %337 = vmatprep.subr.bf16.mxu0 0
    %338 = vmatpush1.bf16.msra.mxu0 0
    %339 = vmatprep.subr.bf16.mxu0 0
    %340 = vmatpush1.bf16.msra.mxu0 0
    %341 = vmatprep.subr.bf16.mxu0 0
    %342 = vmatpush1.bf16.msra.mxu0 0
    %343 = vmatprep.subr.bf16.mxu0 0
    %344 = vmatpush1.bf16.msra.mxu0 0
    %345 = vmatprep.subr.bf16.mxu0 0
    %346 = vmatpush1.bf16.msra.mxu0 0
    %347 = vmatprep.mubr.bf16.mxu0 0
    %348 = vmatmul.mubr.bf16.gmra.mrb[0].mxu0 %v292
    %v349 = vpop.f32.mrb[0].mxu0
    %v350 = vadd.f32 0.0, %v349
    %v351 = vpop.f32.mrb[0].mxu0
    %v352 = vpop.f32.mrb[0].mxu0
    %v353 = vadd.f32 0.0, %v352
    %v354 = vpop.f32.mrb[0].mxu0
    %355 = vmatprep.mubr.bf16.mxu0 0
    %356 = vmatmul.mubr.bf16.gmra.mrb[0].mxu0 %v295
    %v357 = vpop.f32.mrb[0].mxu0
    %v358 = vadd.f32 0.0, %v357
    %v359 = vpop.f32.mrb[0].mxu0
    %v360 = vpop.f32.mrb[0].mxu0
    %v361 = vadd.f32 0.0, %v360
    %v362 = vpop.f32.mrb[0].mxu0
    %363 = vmatprep.mubr.bf16.mxu0 0
    %364 = vmatmul.mubr.bf16.gmra.mrb[0].mxu0 %v298
    %v365 = vpop.f32.mrb[0].mxu0
    %v366 = vadd.f32 0.0, %v365
    %v367 = vpop.f32.mrb[0].mxu0
    %v368 = vpop.f32.mrb[0].mxu0
    %v369 = vadd.f32 0.0, %v368
    %v370 = vpop.f32.mrb[0].mxu0
    %371 = vmatprep.mubr.bf16.mxu0 0
    %372 = vmatmul.mubr.bf16.gmra.mrb[0].mxu0 %v301
    %v373 = vpop.f32.mrb[0].mxu0
    %v374 = vadd.f32 0.0, %v373
    %v375 = vpop.f32.mrb[0].mxu0
    %v376 = vpop.f32.mrb[0].mxu0
    %v377 = vadd.f32 0.0, %v376
    %v378 = vpop.f32.mrb[0].mxu0
    %379 = vmatprep.mubr.bf16.mxu0 0
    %380 = vmatmul.mubr.bf16.gmra.mrb[0].mxu0 %v304
    %v381 = vpop.f32.mrb[0].mxu0
    %v382 = vadd.f32 0.0, %v381
    %v383 = vpop.f32.mrb[0].mxu0
    %v384 = vpop.f32.mrb[0].mxu0
    %v385 = vadd.f32 0.0, %v384
    %v386 = vpop.f32.mrb[0].mxu0
    %387 = vmatprep.mubr.bf16.mxu0 0
    %388 = vmatmul.mubr.bf16.gmra.mrb[0].mxu0 %v307
    %v389 = vpop.f32.mrb[0].mxu0
    %v390 = vadd.f32 0.0, %v389
    %v391 = vpop.f32.mrb[0].mxu0
    %v392 = vpop.f32.mrb[0].mxu0
    %v393 = vadd.f32 0.0, %v392
    %v394 = vpop.f32.mrb[0].mxu0
    %395 = vmatprep.mubr.bf16.mxu0 0
    %396 = vmatmul.mubr.bf16.gmra.mrb[0].mxu0 %v310
    %v397 = vpop.f32.mrb[0].mxu0
    %v398 = vadd.f32 0.0, %v397
    %v399 = vpop.f32.mrb[0].mxu0
    %v400 = vpop.f32.mrb[0].mxu0
    %v401 = vadd.f32 0.0, %v400
    %v402 = vpop.f32.mrb[0].mxu0
    %403 = vmatprep.mubr.bf16.mxu0 0
    %404 = vmatmul.mubr.bf16.gmra.mrb[0].mxu0 %v313
    %v405 = vpop.f32.mrb[0].mxu0
    %v406 = vadd.f32 0.0, %v405
    %v407 = vpop.f32.mrb[0].mxu0
    %v408 = vpop.f32.mrb[0].mxu0
    %v409 = vadd.f32 0.0, %v408
    %v410 = vpop.f32.mrb[0].mxu0
    %411 = vdwg.mxu0
    %412 = vxpose.xlu0.c.b16.start [1/8] %v239, 128
    %413 = vxpose.xlu0.c.b16.cont [2/8] 0, 128
    %414 = vxpose.xlu0.c.b16.cont [3/8] 0, 128
    %415 = vxpose.xlu0.c.b16.cont [4/8] 0, 128
    %416 = vxpose.xlu0.c.b16.cont [5/8] 0, 128
    %417 = vxpose.xlu0.c.b16.cont [6/8] 0, 128
    %418 = vxpose.xlu0.c.b16.cont [7/8] 0, 128
    %419 = vxpose.xlu0.c.b16.end [8/8] 0, 128
    %v420 = vpop.trf.xlu0
    %v421 = vpop.trf.xlu0
    %v422 = vpop.trf.xlu0
    %v423 = vpop.trf.xlu0
    %v424 = vpop.trf.xlu0
    %v425 = vpop.trf.xlu0
    %v426 = vpop.trf.xlu0
    %v427 = vpop.trf.xlu0
    %v429 = vsel %vm290, %v420, 0
    %v432 = vsel %vm290, %v421, 0
    %v435 = vsel %vm290, %v422, 0
    %v438 = vsel %vm290, %v423, 0
    %v441 = vsel %vm290, %v424, 0
    %v444 = vsel %vm290, %v425, 0
    %v447 = vsel %vm290, %v426, 0
    %v450 = vsel %vm290, %v427, 0
    %452 = vmatprep.subr.bf16.mxu0 0
    %453 = vmatpush1.bf16.msra.mxu0 %v241
    %454 = vmatprep.subr.bf16.mxu0 0
    %455 = vmatpush1.bf16.msra.mxu0 0
    %456 = vmatprep.subr.bf16.mxu0 0
    %457 = vmatpush1.bf16.msra.mxu0 0
    %458 = vmatprep.subr.bf16.mxu0 0
    %459 = vmatpush1.bf16.msra.mxu0 0
    %460 = vmatprep.subr.bf16.mxu0 0
    %461 = vmatpush1.bf16.msra.mxu0 0
    %462 = vmatprep.subr.bf16.mxu0 0
    %463 = vmatpush1.bf16.msra.mxu0 0
    %464 = vmatprep.subr.bf16.mxu0 0
    %465 = vmatpush1.bf16.msra.mxu0 0
    %466 = vmatprep.subr.bf16.mxu0 0
    %467 = vmatpush1.bf16.msra.mxu0 0
    %468 = vmatprep.subr.bf16.mxu0 0
    %469 = vmatpush1.bf16.msra.mxu0 0
    %470 = vmatprep.subr.bf16.mxu0 0
    %471 = vmatpush1.bf16.msra.mxu0 0
    %472 = vmatprep.subr.bf16.mxu0 0
    %473 = vmatpush1.bf16.msra.mxu0 0
    %474 = vmatprep.subr.bf16.mxu0 0
    %475 = vmatpush1.bf16.msra.mxu0 0
    %476 = vmatprep.subr.bf16.mxu0 0
    %477 = vmatpush1.bf16.msra.mxu0 0
    %478 = vmatprep.subr.bf16.mxu0 0
    %479 = vmatpush1.bf16.msra.mxu0 0
    %480 = vmatprep.subr.bf16.mxu0 0
    %481 = vmatpush1.bf16.msra.mxu0 0
    %482 = vmatprep.subr.bf16.mxu0 0
    %483 = vmatpush1.bf16.msra.mxu0 0
    %484 = vmatprep.mubr.bf16.mxu0 0
    %485 = vmatmul.mubr.bf16.gmra.mrb[0].mxu0 %v429
    %v486 = vpop.f32.mrb[0].mxu0
    %v487 = vadd.f32 0.0, %v486
    %v488 = vpop.f32.mrb[0].mxu0
    %v489 = vpop.f32.mrb[0].mxu0
    %v490 = vadd.f32 0.0, %v489
    %v491 = vpop.f32.mrb[0].mxu0
    %492 = vmatprep.mubr.bf16.mxu0 0
    %493 = vmatmul.mubr.bf16.gmra.mrb[0].mxu0 %v432
    %v494 = vpop.f32.mrb[0].mxu0
    %v495 = vadd.f32 0.0, %v494
    %v496 = vpop.f32.mrb[0].mxu0
    %v497 = vpop.f32.mrb[0].mxu0
    %v498 = vadd.f32 0.0, %v497
    %v499 = vpop.f32.mrb[0].mxu0
    %500 = vmatprep.mubr.bf16.mxu0 0
    %501 = vmatmul.mubr.bf16.gmra.mrb[0].mxu0 %v435
    %v502 = vpop.f32.mrb[0].mxu0
    %v503 = vadd.f32 0.0, %v502
    %v504 = vpop.f32.mrb[0].mxu0
    %v505 = vpop.f32.mrb[0].mxu0
    %v506 = vadd.f32 0.0, %v505
    %v507 = vpop.f32.mrb[0].mxu0
    %508 = vmatprep.mubr.bf16.mxu0 0
    %509 = vmatmul.mubr.bf16.gmra.mrb[0].mxu0 %v438
    %v510 = vpop.f32.mrb[0].mxu0
    %v511 = vadd.f32 0.0, %v510
    %v512 = vpop.f32.mrb[0].mxu0
    %v513 = vpop.f32.mrb[0].mxu0
    %v514 = vadd.f32 0.0, %v513
    %v515 = vpop.f32.mrb[0].mxu0
    %516 = vmatprep.mubr.bf16.mxu0 0
    %517 = vmatmul.mubr.bf16.gmra.mrb[0].mxu0 %v441
    %v518 = vpop.f32.mrb[0].mxu0
    %v519 = vadd.f32 0.0, %v518
    %v520 = vpop.f32.mrb[0].mxu0
    %v521 = vpop.f32.mrb[0].mxu0
    %v522 = vadd.f32 0.0, %v521
    %v523 = vpop.f32.mrb[0].mxu0
    %524 = vmatprep.mubr.bf16.mxu0 0
    %525 = vmatmul.mubr.bf16.gmra.mrb[0].mxu0 %v444
    %v526 = vpop.f32.mrb[0].mxu0
    %v527 = vadd.f32 0.0, %v526
    %v528 = vpop.f32.mrb[0].mxu0
    %v529 = vpop.f32.mrb[0].mxu0
    %v530 = vadd.f32 0.0, %v529
    %v531 = vpop.f32.mrb[0].mxu0
    %532 = vmatprep.mubr.bf16.mxu0 0
    %533 = vmatmul.mubr.bf16.gmra.mrb[0].mxu0 %v447
    %v534 = vpop.f32.mrb[0].mxu0
    %v535 = vadd.f32 0.0, %v534
    %v536 = vpop.f32.mrb[0].mxu0
    %v537 = vpop.f32.mrb[0].mxu0
    %v538 = vadd.f32 0.0, %v537
    %v539 = vpop.f32.mrb[0].mxu0
    %540 = vmatprep.mubr.bf16.mxu0 0
    %541 = vmatmul.mubr.bf16.gmra.mrb[0].mxu0 %v450
    %v542 = vpop.f32.mrb[0].mxu0
    %v543 = vadd.f32 0.0, %v542
    %v544 = vpop.f32.mrb[0].mxu0
    %v545 = vpop.f32.mrb[0].mxu0
    %v546 = vadd.f32 0.0, %v545
    %v547 = vpop.f32.mrb[0].mxu0
    %548 = vdwg.mxu0
    %v549 = vadd.f32 %v242, %v350
    %v550 = vadd.f32 %v243, %v353
    %v551 = vadd.f32 %v244, %v358
    %v552 = vadd.f32 %v245, %v361
    %v553 = vadd.f32 %v246, %v366
    %v554 = vadd.f32 %v247, %v369
    %v555 = vadd.f32 %v248, %v374
    %v556 = vadd.f32 %v249, %v377
    %v557 = vadd.f32 %v250, %v382
    %v558 = vadd.f32 %v251, %v385
    %v559 = vadd.f32 %v252, %v390
    %v560 = vadd.f32 %v253, %v393
    %v561 = vadd.f32 %v254, %v398
    %v562 = vadd.f32 %v255, %v401
    %v563 = vadd.f32 %v256, %v406
    %v564 = vadd.f32 %v257, %v409
    %v565 = vadd.f32 %v258, %v487
    %v566 = vadd.f32 %v259, %v490
    %v567 = vadd.f32 %v260, %v495
    %v568 = vadd.f32 %v261, %v498
    %v569 = vadd.f32 %v262, %v503
    %v570 = vadd.f32 %v263, %v506
    %v571 = vadd.f32 %v264, %v511
    %v572 = vadd.f32 %v265, %v514
    %v573 = vadd.f32 %v266, %v519
    %v574 = vadd.f32 %v267, %v522
    %v575 = vadd.f32 %v268, %v527
    %v576 = vadd.f32 %v269, %v530
    %v577 = vadd.f32 %v270, %v535
    %v578 = vadd.f32 %v271, %v538
    %v579 = vadd.f32 %v272, %v543
    %v580 = vadd.f32 %v273, %v546
    %581 = vst [vmem:[#allocation2] sm:$0xff] %v549
    %582 = vst [vmem:[#allocation2 + $0x8] sm:$0xff] %v550
    %583 = vst [vmem:[#allocation2 + $0x10] sm:$0xff] %v551
    %584 = vst [vmem:[#allocation2 + $0x18] sm:$0xff] %v552
    %585 = vst [vmem:[#allocation2 + $0x20] sm:$0xff] %v553
    %586 = vst [vmem:[#allocation2 + $0x28] sm:$0xff] %v554
    %587 = vst [vmem:[#allocation2 + $0x30] sm:$0xff] %v555
    %588 = vst [vmem:[#allocation2 + $0x38] sm:$0xff] %v556
    %589 = vst [vmem:[#allocation2 + $0x40] sm:$0xff] %v557
    %590 = vst [vmem:[#allocation2 + $0x48] sm:$0xff] %v558
    %591 = vst [vmem:[#allocation2 + $0x50] sm:$0xff] %v559
    %592 = vst [vmem:[#allocation2 + $0x58] sm:$0xff] %v560
    %593 = vst [vmem:[#allocation2 + $0x60] sm:$0xff] %v561
    %594 = vst [vmem:[#allocation2 + $0x68] sm:$0xff] %v562
    %595 = vst [vmem:[#allocation2 + $0x70] sm:$0xff] %v563
    %596 = vst [vmem:[#allocation2 + $0x78] sm:$0xff] %v564
    %597 = vst [vmem:[#allocation2 + $0x80] sm:$0xff] %v565
    %598 = vst [vmem:[#allocation2 + $0x88] sm:$0xff] %v566
    %599 = vst [vmem:[#allocation2 + $0x90] sm:$0xff] %v567
    %600 = vst [vmem:[#allocation2 + $0x98] sm:$0xff] %v568
    %601 = vst [vmem:[#allocation2 + $0xa0] sm:$0xff] %v569
    %602 = vst [vmem:[#allocation2 + $0xa8] sm:$0xff] %v570
    %603 = vst [vmem:[#allocation2 + $0xb0] sm:$0xff] %v571
    %604 = vst [vmem:[#allocation2 + $0xb8] sm:$0xff] %v572
    %605 = vst [vmem:[#allocation2 + $0xc0] sm:$0xff] %v573
    %606 = vst [vmem:[#allocation2 + $0xc8] sm:$0xff] %v574
    %607 = vst [vmem:[#allocation2 + $0xd0] sm:$0xff] %v575
    %608 = vst [vmem:[#allocation2 + $0xd8] sm:$0xff] %v576
    %609 = vst [vmem:[#allocation2 + $0xe0] sm:$0xff] %v577
    %610 = vst [vmem:[#allocation2 + $0xe8] sm:$0xff] %v578
    %611 = vst [vmem:[#allocation2 + $0xf0] sm:$0xff] %v579
    %612 = vst [vmem:[#allocation2 + $0xf8] sm:$0xff] %v580
    // Predicated region
    $region22: #{tpu_custom_call.1} parent=1 // pred_check
      %p613 = pneg %p41
    $region23: #{tpu_custom_call.1} parent=1 // pred_check_branch
      %615 = sbr.rel (%p613) target = $region25
    $region24: #{tpu_custom_call.1} parent=1 // pred_region
      %v616 = vld [vmem:[#allocation2] sm:$0xff]
      %v617 = vld [vmem:[#allocation2 + $0x8] sm:$0xff]
      %v618 = vld [vmem:[#allocation2 + $0x10] sm:$0xff]
      %v619 = vld [vmem:[#allocation2 + $0x18] sm:$0xff]
      %v620 = vld [vmem:[#allocation2 + $0x20] sm:$0xff]
      %v621 = vld [vmem:[#allocation2 + $0x28] sm:$0xff]
      %v622 = vld [vmem:[#allocation2 + $0x30] sm:$0xff]
      %v623 = vld [vmem:[#allocation2 + $0x38] sm:$0xff]
      %v624 = vld [vmem:[#allocation2 + $0x40] sm:$0xff]
      %v625 = vld [vmem:[#allocation2 + $0x48] sm:$0xff]
      %v626 = vld [vmem:[#allocation2 + $0x50] sm:$0xff]
      %v627 = vld [vmem:[#allocation2 + $0x58] sm:$0xff]
      %v628 = vld [vmem:[#allocation2 + $0x60] sm:$0xff]
      %v629 = vld [vmem:[#allocation2 + $0x68] sm:$0xff]
      %v630 = vld [vmem:[#allocation2 + $0x70] sm:$0xff]
      %v631 = vld [vmem:[#allocation2 + $0x78] sm:$0xff]
      %v632 = vld [vmem:[#allocation2 + $0x80] sm:$0xff]
      %v633 = vld [vmem:[#allocation2 + $0x88] sm:$0xff]
      %v634 = vld [vmem:[#allocation2 + $0x90] sm:$0xff]
      %v635 = vld [vmem:[#allocation2 + $0x98] sm:$0xff]
      %v636 = vld [vmem:[#allocation2 + $0xa0] sm:$0xff]
      %v637 = vld [vmem:[#allocation2 + $0xa8] sm:$0xff]
      %v638 = vld [vmem:[#allocation2 + $0xb0] sm:$0xff]
      %v639 = vld [vmem:[#allocation2 + $0xb8] sm:$0xff]
      %v640 = vld [vmem:[#allocation2 + $0xc0] sm:$0xff]
      %v641 = vld [vmem:[#allocation2 + $0xc8] sm:$0xff]
      %v642 = vld [vmem:[#allocation2 + $0xd0] sm:$0xff]
      %v643 = vld [vmem:[#allocation2 + $0xd8] sm:$0xff]
      %v644 = vld [vmem:[#allocation2 + $0xe0] sm:$0xff]
      %v645 = vld [vmem:[#allocation2 + $0xe8] sm:$0xff]
      %v646 = vld [vmem:[#allocation2 + $0xf0] sm:$0xff]
      %v647 = vld [vmem:[#allocation2 + $0xf8] sm:$0xff]
      %v648 = vmul.f32 %v616, 0.70710677
      %v649 = vmul.f32 %v617, 0.70710677
      %v650 = vmul.f32 %v618, 0.70710677
      %v651 = vmul.f32 %v619, 0.70710677
      %v652 = vmul.f32 %v620, 0.70710677
      %v653 = vmul.f32 %v621, 0.70710677
      %v654 = vmul.f32 %v622, 0.70710677
      %v655 = vmul.f32 %v623, 0.70710677
      %v656 = vmul.f32 %v624, 0.70710677
      %v657 = vmul.f32 %v625, 0.70710677
      %v658 = vmul.f32 %v626, 0.70710677
      %v659 = vmul.f32 %v627, 0.70710677
      %v660 = vmul.f32 %v628, 0.70710677
      %v661 = vmul.f32 %v629, 0.70710677
      %v662 = vmul.f32 %v630, 0.70710677
      %v663 = vmul.f32 %v631, 0.70710677
      %v664 = vmul.f32 %v632, 0.70710677
      %v665 = vmul.f32 %v633, 0.70710677
      %v666 = vmul.f32 %v634, 0.70710677
      %v667 = vmul.f32 %v635, 0.70710677
      %v668 = vmul.f32 %v636, 0.70710677
      %v669 = vmul.f32 %v637, 0.70710677
      %v670 = vmul.f32 %v638, 0.70710677
      %v671 = vmul.f32 %v639, 0.70710677
      %v672 = vmul.f32 %v640, 0.70710677
      %v673 = vmul.f32 %v641, 0.70710677
      %v674 = vmul.f32 %v642, 0.70710677
      %v675 = vmul.f32 %v643, 0.70710677
      %v676 = vmul.f32 %v644, 0.70710677
      %v677 = vmul.f32 %v645, 0.70710677
      %v678 = vmul.f32 %v646, 0.70710677
      %v679 = vmul.f32 %v647, 0.70710677
      %v680 = vxor.u32 %v648, 2147483648
      %v681 = vxor.u32 %v649, 2147483648
      %v682 = vxor.u32 %v650, 2147483648
      %v683 = vxor.u32 %v651, 2147483648
      %v684 = vxor.u32 %v652, 2147483648
      %v685 = vxor.u32 %v653, 2147483648
      %v686 = vxor.u32 %v654, 2147483648
      %v687 = vxor.u32 %v655, 2147483648
      %v688 = vxor.u32 %v656, 2147483648
      %v689 = vxor.u32 %v657, 2147483648
      %v690 = vxor.u32 %v658, 2147483648
      %v691 = vxor.u32 %v659, 2147483648
      %v692 = vxor.u32 %v660, 2147483648
      %v693 = vxor.u32 %v661, 2147483648
      %v694 = vxor.u32 %v662, 2147483648
      %v695 = vxor.u32 %v663, 2147483648
      %v696 = vxor.u32 %v664, 2147483648
      %v697 = vxor.u32 %v665, 2147483648
      %v698 = vxor.u32 %v666, 2147483648
      %v699 = vxor.u32 %v667, 2147483648
      %v700 = vxor.u32 %v668, 2147483648
      %v701 = vxor.u32 %v669, 2147483648
      %v702 = vxor.u32 %v670, 2147483648
      %v703 = vxor.u32 %v671, 2147483648
      %v704 = vxor.u32 %v672, 2147483648
      %v705 = vxor.u32 %v673, 2147483648
      %v706 = vxor.u32 %v674, 2147483648
      %v707 = vxor.u32 %v675, 2147483648
      %v708 = vxor.u32 %v676, 2147483648
      %v709 = vxor.u32 %v677, 2147483648
      %v710 = vxor.u32 %v678, 2147483648
      %v711 = vxor.u32 %v679, 2147483648
      %v712 = vmul.f32 %v680, 1.442695
      %v713 = vpow.pop %v712
      %v714 = vmul.f32 %v681, 1.442695
      %v715 = vpow.pop %v714
      %v716 = vmul.f32 %v682, 1.442695
      %v717 = vpow.pop %v716
      %v718 = vmul.f32 %v683, 1.442695
      %v719 = vpow.pop %v718
      %v720 = vmul.f32 %v684, 1.442695
      %v721 = vpow.pop %v720
      %v722 = vmul.f32 %v685, 1.442695
      %v723 = vpow.pop %v722
      %v724 = vmul.f32 %v686, 1.442695
      %v725 = vpow.pop %v724
      %v726 = vmul.f32 %v687, 1.442695
      %v727 = vpow.pop %v726
      %v728 = vmul.f32 %v688, 1.442695
      %v729 = vpow.pop %v728
      %v730 = vmul.f32 %v689, 1.442695
      %v731 = vpow.pop %v730
      %v732 = vmul.f32 %v690, 1.442695
      %v733 = vpow.pop %v732
      %v734 = vmul.f32 %v691, 1.442695
      %v735 = vpow.pop %v734
      %v736 = vmul.f32 %v692, 1.442695
      %v737 = vpow.pop %v736
      %v738 = vmul.f32 %v693, 1.442695
      %v739 = vpow.pop %v738
      %v740 = vmul.f32 %v694, 1.442695
      %v741 = vpow.pop %v740
      %v742 = vmul.f32 %v695, 1.442695
      %v743 = vpow.pop %v742
      %v744 = vmul.f32 %v696, 1.442695
      %v745 = vpow.pop %v744
      %v746 = vmul.f32 %v697, 1.442695
      %v747 = vpow.pop %v746
      %v748 = vmul.f32 %v698, 1.442695
      %v749 = vpow.pop %v748
      %v750 = vmul.f32 %v699, 1.442695
      %v751 = vpow.pop %v750
      %v752 = vmul.f32 %v700, 1.442695
      %v753 = vpow.pop %v752
      %v754 = vmul.f32 %v701, 1.442695
      %v755 = vpow.pop %v754
      %v756 = vmul.f32 %v702, 1.442695
      %v757 = vpow.pop %v756
      %v758 = vmul.f32 %v703, 1.442695
      %v759 = vpow.pop %v758
      %v760 = vmul.f32 %v704, 1.442695
      %v761 = vpow.pop %v760
      %v762 = vmul.f32 %v705, 1.442695
      %v763 = vpow.pop %v762
      %v764 = vmul.f32 %v706, 1.442695
      %v765 = vpow.pop %v764
      %v766 = vmul.f32 %v707, 1.442695
      %v767 = vpow.pop %v766
      %v768 = vmul.f32 %v708, 1.442695
      %v769 = vpow.pop %v768
      %v770 = vmul.f32 %v709, 1.442695
      %v771 = vpow.pop %v770
      %v772 = vmul.f32 %v710, 1.442695
      %v773 = vpow.pop %v772
      %v774 = vmul.f32 %v711, 1.442695
      %v775 = vpow.pop %v774
      %v776 = vadd.f32 %v713, 1.0
      %v777 = vadd.f32 %v715, 1.0
      %v778 = vadd.f32 %v717, 1.0
      %v779 = vadd.f32 %v719, 1.0
      %v780 = vadd.f32 %v721, 1.0
      %v781 = vadd.f32 %v723, 1.0
      %v782 = vadd.f32 %v725, 1.0
      %v783 = vadd.f32 %v727, 1.0
      %v784 = vadd.f32 %v729, 1.0
      %v785 = vadd.f32 %v731, 1.0
      %v786 = vadd.f32 %v733, 1.0
      %v787 = vadd.f32 %v735, 1.0
      %v788 = vadd.f32 %v737, 1.0
      %v789 = vadd.f32 %v739, 1.0
      %v790 = vadd.f32 %v741, 1.0
      %v791 = vadd.f32 %v743, 1.0
      %v792 = vadd.f32 %v745, 1.0
      %v793 = vadd.f32 %v747, 1.0
      %v794 = vadd.f32 %v749, 1.0
      %v795 = vadd.f32 %v751, 1.0
      %v796 = vadd.f32 %v753, 1.0
      %v797 = vadd.f32 %v755, 1.0
      %v798 = vadd.f32 %v757, 1.0
      %v799 = vadd.f32 %v759, 1.0
      %v800 = vadd.f32 %v761, 1.0
      %v801 = vadd.f32 %v763, 1.0
      %v802 = vadd.f32 %v765, 1.0
      %v803 = vadd.f32 %v767, 1.0
      %v804 = vadd.f32 %v769, 1.0
      %v805 = vadd.f32 %v771, 1.0
      %v806 = vadd.f32 %v773, 1.0
      %v807 = vadd.f32 %v775, 1.0
      %v808 = vrcp.pop %v776
      %v809 = vmul.f32 1.0, %v808
      %v810 = vrcp.pop %v777
      %v811 = vmul.f32 1.0, %v810
      %v812 = vrcp.pop %v778
      %v813 = vmul.f32 1.0, %v812
      %v814 = vrcp.pop %v779
      %v815 = vmul.f32 1.0, %v814
      %v816 = vrcp.pop %v780
      %v817 = vmul.f32 1.0, %v816
      %v818 = vrcp.pop %v781
      %v819 = vmul.f32 1.0, %v818
      %v820 = vrcp.pop %v782
      %v821 = vmul.f32 1.0, %v820
      %v822 = vrcp.pop %v783
      %v823 = vmul.f32 1.0, %v822
      %v824 = vrcp.pop %v784
      %v825 = vmul.f32 1.0, %v824
      %v826 = vrcp.pop %v785
      %v827 = vmul.f32 1.0, %v826
      %v828 = vrcp.pop %v786
      %v829 = vmul.f32 1.0, %v828
      %v830 = vrcp.pop %v787
      %v831 = vmul.f32 1.0, %v830
      %v832 = vrcp.pop %v788
      %v833 = vmul.f32 1.0, %v832
      %v834 = vrcp.pop %v789
      %v835 = vmul.f32 1.0, %v834
      %v836 = vrcp.pop %v790
      %v837 = vmul.f32 1.0, %v836
      %v838 = vrcp.pop %v791
      %v839 = vmul.f32 1.0, %v838
      %v840 = vrcp.pop %v792
      %v841 = vmul.f32 1.0, %v840
      %v842 = vrcp.pop %v793
      %v843 = vmul.f32 1.0, %v842
      %v844 = vrcp.pop %v794
      %v845 = vmul.f32 1.0, %v844
      %v846 = vrcp.pop %v795
      %v847 = vmul.f32 1.0, %v846
      %v848 = vrcp.pop %v796
      %v849 = vmul.f32 1.0, %v848
      %v850 = vrcp.pop %v797
      %v851 = vmul.f32 1.0, %v850
      %v852 = vrcp.pop %v798
      %v853 = vmul.f32 1.0, %v852
      %v854 = vrcp.pop %v799
      %v855 = vmul.f32 1.0, %v854
      %v856 = vrcp.pop %v800
      %v857 = vmul.f32 1.0, %v856
      %v858 = vrcp.pop %v801
      %v859 = vmul.f32 1.0, %v858
      %v860 = vrcp.pop %v802
      %v861 = vmul.f32 1.0, %v860
      %v862 = vrcp.pop %v803
      %v863 = vmul.f32 1.0, %v862
      %v864 = vrcp.pop %v804
      %v865 = vmul.f32 1.0, %v864
      %v866 = vrcp.pop %v805
      %v867 = vmul.f32 1.0, %v866
      %v868 = vrcp.pop %v806
      %v869 = vmul.f32 1.0, %v868
      %v870 = vrcp.pop %v807
      %v871 = vmul.f32 1.0, %v870
      %872 = vst [vmem:[#allocation8] sm:$0xff] %v809
      %873 = vst [vmem:[#allocation8 + $0x8] sm:$0xff] %v811
      %874 = vst [vmem:[#allocation8 + $0x10] sm:$0xff] %v813
      %875 = vst [vmem:[#allocation8 + $0x18] sm:$0xff] %v815
      %876 = vst [vmem:[#allocation8 + $0x20] sm:$0xff] %v817
      %877 = vst [vmem:[#allocation8 + $0x28] sm:$0xff] %v819
      %878 = vst [vmem:[#allocation8 + $0x30] sm:$0xff] %v821
      %879 = vst [vmem:[#allocation8 + $0x38] sm:$0xff] %v823
      %880 = vst [vmem:[#allocation8 + $0x40] sm:$0xff] %v825
      %881 = vst [vmem:[#allocation8 + $0x48] sm:$0xff] %v827
      %882 = vst [vmem:[#allocation8 + $0x50] sm:$0xff] %v829
      %883 = vst [vmem:[#allocation8 + $0x58] sm:$0xff] %v831
      %884 = vst [vmem:[#allocation8 + $0x60] sm:$0xff] %v833
      %885 = vst [vmem:[#allocation8 + $0x68] sm:$0xff] %v835
      %886 = vst [vmem:[#allocation8 + $0x70] sm:$0xff] %v837
      %887 = vst [vmem:[#allocation8 + $0x78] sm:$0xff] %v839
      %888 = vst [vmem:[#allocation8 + $0x80] sm:$0xff] %v841
      %889 = vst [vmem:[#allocation8 + $0x88] sm:$0xff] %v843
      %890 = vst [vmem:[#allocation8 + $0x90] sm:$0xff] %v845
      %891 = vst [vmem:[#allocation8 + $0x98] sm:$0xff] %v847
      %892 = vst [vmem:[#allocation8 + $0xa0] sm:$0xff] %v849
      %893 = vst [vmem:[#allocation8 + $0xa8] sm:$0xff] %v851
      %894 = vst [vmem:[#allocation8 + $0xb0] sm:$0xff] %v853
      %895 = vst [vmem:[#allocation8 + $0xb8] sm:$0xff] %v855
      %896 = vst [vmem:[#allocation8 + $0xc0] sm:$0xff] %v857
      %897 = vst [vmem:[#allocation8 + $0xc8] sm:$0xff] %v859
      %898 = vst [vmem:[#allocation8 + $0xd0] sm:$0xff] %v861
      %899 = vst [vmem:[#allocation8 + $0xd8] sm:$0xff] %v863
      %900 = vst [vmem:[#allocation8 + $0xe0] sm:$0xff] %v865
      %901 = vst [vmem:[#allocation8 + $0xe8] sm:$0xff] %v867
      %902 = vst [vmem:[#allocation8 + $0xf0] sm:$0xff] %v869
      %903 = vst [vmem:[#allocation8 + $0xf8] sm:$0xff] %v871
    $region25: #{tpu_custom_call.1} parent=1 // pred_fallthru
      _
    // Predicated region
    $region26: #{tpu_custom_call.1} parent=1 // pred_check
      _
    $region27: #{tpu_custom_call.1} parent=1 // pred_check_branch
      %905 = sbr.rel (0) target = $region29
    $region28: #{tpu_custom_call.1} parent=1 // pred_region
      %s907 = ssub.s32 4096, 4096
      %908 = vsyncadd [#allocation5], %s907
      %s909 = sshll.u32 [#allocation8], 4
      %s910 = int_to_ptr.vmem [resolvable:$true] %s909
      %915 = dma.vmem_to_hbm [thread:$0]  %s910, 4096, %s2, [#allocation5], 128, 128, 8
    $region29: #{tpu_custom_call.1} parent=1 // pred_fallthru
      _
    // Predicated region
    $region30: #{tpu_custom_call.1} parent=1 // pred_check
      _
    $region31: #{tpu_custom_call.1} parent=1 // pred_check_branch
      %917 = sbr.rel (0) target = $region33
    $region32: #{tpu_custom_call.1} parent=1 // pred_region
      %918 = dma.done [#allocation5], 4096
    $region33: #{tpu_custom_call.1} parent=1 // pred_fallthru
      _
    %919 = vsyncpa [#allocation4], 1
    %920 = vsyncpa [#allocation7], 1
    %921 = vsyncpa [#allocation5], 1

</llo_original>
